<compile_context>
chip_gen: v7x
topology: tpu7x:2x2x1
jax: 0.10.0
libtpu: 0.0.40
codegen_flags: <defaults>
</compile_context>

<pallas_src>
import functools

import jax
import jax.numpy as jnp
from jax.experimental import pallas as pl
from jax.experimental.pallas import tpu as pltpu


def _make_heads_kernel(x_ref, o_ref, *, num_heads: int, head_dim: int):
    # x_ref: (1, TILE_L, num_heads * head_dim)
    # o_ref: (1, num_heads, TILE_L, head_dim)
    # Static per-head slices: start offsets are static multiples of head_dim,
    # so these lower to aligned, lane-dense loads/stores (no masking).
    for h in range(num_heads):
        o_ref[0, h, :, :] = x_ref[0, :, h * head_dim:(h + 1) * head_dim]


def _pick_tile_l(length: int, input_dim: int, itemsize: int) -> int:
    """Largest length-tile that (a) divides `length`, (b) is a multiple of the
    sublane packing for this dtype, and (c) keeps double-buffered in+out
    blocks comfortably inside v7x's VMEM budget. Falls back to the full
    length (always a legal block) if no such divisor exists."""
    # sublane packing: 8 rows (f32), 16 (bf16/f16), 32 (int8/fp8)
    pack = 8 * max(1, 4 // itemsize)
    # ~6 MiB per block => ~24 MiB total with double-buffered input + output.
    target_block_bytes = 6 * 1024 * 1024
    max_rows = max(pack, target_block_bytes // max(1, input_dim * itemsize))

    best = 0
    t = pack
    while t <= min(length, max_rows):
        if length % t == 0:
            best = t
        t += pack
    if best == 0:
        # No aligned divisor <= budget: use the full length (block == full dim
        # is always legal). For the small shapes this module uses, this fits.
        best = length
    return best


def make_heads(x: jax.Array, num_heads: int) -> jax.Array:
    """x: (batch, length, input_dim) -> (batch, num_heads, length, head_dim)."""
    batch, length, input_dim = x.shape
    assert input_dim % num_heads == 0, "num_heads must divide evenly into input_dim!"
    head_dim = input_dim // num_heads

    itemsize = jnp.dtype(x.dtype).itemsize
    tile_l = _pick_tile_l(length, input_dim, itemsize)
    grid = (batch, length // tile_l)

    # Contiguous input slab: full last axis, tile_l rows.
    in_spec = pl.BlockSpec(
        (1, tile_l, input_dim),
        lambda b, l: (b, l, 0),
    )
    # Output: all heads for this (b, length-tile); last dim = full head_dim
    # (lane-dense), second-to-last = tile_l (sublane-aligned or full dim).
    out_spec = pl.BlockSpec(
        (1, num_heads, tile_l, head_dim),
        lambda b, l: (b, 0, l, 0),
    )

    # VMEM: in + out blocks, double-buffered.
    block_bytes = tile_l * input_dim * itemsize
    needed_vmem = 4 * block_bytes
    vmem_limit = int(min(max(32 * 1024 * 1024, needed_vmem * 2), 64 * 1024 * 1024))

    total_bytes = x.size * itemsize
    cost = pl.CostEstimate(
        flops=0,
        transcendentals=0,
        bytes_accessed=2 * total_bytes,  # pure copy: read + write
    )

    kernel = functools.partial(
        _make_heads_kernel, num_heads=num_heads, head_dim=head_dim
    )

    return pl.pallas_call(
        kernel,
        out_shape=jax.ShapeDtypeStruct((batch, num_heads, length, head_dim), x.dtype),
        grid_spec=pltpu.PrefetchScalarGridSpec(
            num_scalar_prefetch=0,
            grid=grid,
            in_specs=[in_spec],
            out_specs=out_spec,
        ),
        compiler_params=pltpu.CompilerParams(
            dimension_semantics=("parallel", "parallel"),
            vmem_limit_bytes=vmem_limit,
        ),
        cost_estimate=cost,
    )(x)


if __name__ == "__main__":
    # Shapes consistent with the module's stream spec:
    #   input stream shape  (batch, length, input_dim)
    #   output stream shape (batch, num_heads, length, head_dim)
    batch, length, num_heads, head_dim = 2, 8, 4, 128
    input_dim = num_heads * head_dim

    key = jax.random.PRNGKey(0)
    x = jax.random.normal(key, (batch, length, input_dim), dtype=jnp.float32)

    y = make_heads(x, num_heads)
    y = jax.block_until_ready(y)

    # Reference: pure-JAX rearrange 'b l (h d) -> b h l d'
    y_ref = jnp.transpose(
        x.reshape(batch, length, num_heads, head_dim), (0, 2, 1, 3)
    )

    assert y.shape == (batch, num_heads, length, head_dim), y.shape
    assert jnp.array_equal(y, y_ref), "mismatch vs reference rearrange"

    # Also check a larger, length-tiled shape exercises the same code path.
    x2 = jax.random.normal(jax.random.PRNGKey(1), (2, 256, input_dim), jnp.bfloat16)
    y2 = jax.block_until_ready(make_heads(x2, num_heads))
    y2_ref = jnp.transpose(x2.reshape(2, 256, num_heads, head_dim), (0, 2, 1, 3))
    assert jnp.array_equal(y2, y2_ref), "mismatch vs reference rearrange (tiled)"

    print("KERNEL_OK")
</pallas_src>

<mosaic_0001>
module attributes {stable_mosaic.version = 11 : i64} {
  func.func @_make_heads_kernel(%arg0: i32, %arg1: i32, %arg2: memref<1x8x512xf32, #tpu.memory_space<vmem>>, %arg3: memref<1x4x8x128xf32, #tpu.memory_space<vmem>>) attributes {dimension_semantics = [#tpu.dimension_semantics<parallel>, #tpu.dimension_semantics<parallel>], iteration_bounds = array<i64: 2, 1>, scalar_prefetch = 0 : i64, scratch_operands = 0 : i64, tpu.core_type = #tpu.core_type<tc>, window_params = [{transform_indices = @transform_0, window_bounds = array<i64: 1, 8, 512>}, {transform_indices = @transform_1, window_bounds = array<i64: 1, 4, 8, 128>}]} {
    %c0 = arith.constant 0 : index
    %c0_0 = arith.constant 0 : index
    %c0_1 = arith.constant 0 : index
    %0 = vector.load %arg2[%c0, %c0_0, %c0_1] : memref<1x8x512xf32, #tpu.memory_space<vmem>>, vector<1x8x128xf32>
    %1 = vector.shape_cast %0 : vector<1x8x128xf32> to vector<8x128xf32>
    %c0_2 = arith.constant 0 : index
    %c0_3 = arith.constant 0 : index
    %c0_4 = arith.constant 0 : index
    %c0_5 = arith.constant 0 : index
    %2 = vector.load %arg3[%c0_2, %c0_3, %c0_4, %c0_5] : memref<1x4x8x128xf32, #tpu.memory_space<vmem>>, vector<1x1x8x128xf32>
    %3 = vector.shape_cast %2 : vector<1x1x8x128xf32> to vector<8x128xf32>
    %4 = vector.shape_cast %1 : vector<8x128xf32> to vector<1x1x8x128xf32>
    tpu.vector_store %arg3[%c0_2, %c0_3, %c0_4, %c0_5], %4 {strides = array<i32>} : memref<1x4x8x128xf32, #tpu.memory_space<vmem>>, vector<1x1x8x128xf32>,
    %c0_6 = arith.constant 0 : index
    %c0_7 = arith.constant 0 : index
    %c128 = arith.constant 128 : index
    %5 = vector.load %arg2[%c0_6, %c0_7, %c128] : memref<1x8x512xf32, #tpu.memory_space<vmem>>, vector<1x8x128xf32>
    %6 = vector.shape_cast %5 : vector<1x8x128xf32> to vector<8x128xf32>
    %c0_8 = arith.constant 0 : index
    %c1 = arith.constant 1 : index
    %c0_9 = arith.constant 0 : index
    %c0_10 = arith.constant 0 : index
    %7 = vector.load %arg3[%c0_8, %c1, %c0_9, %c0_10] : memref<1x4x8x128xf32, #tpu.memory_space<vmem>>, vector<1x1x8x128xf32>
    %8 = vector.shape_cast %7 : vector<1x1x8x128xf32> to vector<8x128xf32>
    %9 = vector.shape_cast %6 : vector<8x128xf32> to vector<1x1x8x128xf32>
    tpu.vector_store %arg3[%c0_8, %c1, %c0_9, %c0_10], %9 {strides = array<i32>} : memref<1x4x8x128xf32, #tpu.memory_space<vmem>>, vector<1x1x8x128xf32>,
    %c0_11 = arith.constant 0 : index
    %c0_12 = arith.constant 0 : index
    %c256 = arith.constant 256 : index
    %10 = vector.load %arg2[%c0_11, %c0_12, %c256] : memref<1x8x512xf32, #tpu.memory_space<vmem>>, vector<1x8x128xf32>
    %11 = vector.shape_cast %10 : vector<1x8x128xf32> to vector<8x128xf32>
    %c0_13 = arith.constant 0 : index
    %c2 = arith.constant 2 : index
    %c0_14 = arith.constant 0 : index
    %c0_15 = arith.constant 0 : index
    %12 = vector.load %arg3[%c0_13, %c2, %c0_14, %c0_15] : memref<1x4x8x128xf32, #tpu.memory_space<vmem>>, vector<1x1x8x128xf32>
    %13 = vector.shape_cast %12 : vector<1x1x8x128xf32> to vector<8x128xf32>
    %14 = vector.shape_cast %11 : vector<8x128xf32> to vector<1x1x8x128xf32>
    tpu.vector_store %arg3[%c0_13, %c2, %c0_14, %c0_15], %14 {strides = array<i32>} : memref<1x4x8x128xf32, #tpu.memory_space<vmem>>, vector<1x1x8x128xf32>,
    %c0_16 = arith.constant 0 : index
    %c0_17 = arith.constant 0 : index
    %c384 = arith.constant 384 : index
    %15 = vector.load %arg2[%c0_16, %c0_17, %c384] : memref<1x8x512xf32, #tpu.memory_space<vmem>>, vector<1x8x128xf32>
    %16 = vector.shape_cast %15 : vector<1x8x128xf32> to vector<8x128xf32>
    %c0_18 = arith.constant 0 : index
    %c3 = arith.constant 3 : index
    %c0_19 = arith.constant 0 : index
    %c0_20 = arith.constant 0 : index
    %17 = vector.load %arg3[%c0_18, %c3, %c0_19, %c0_20] : memref<1x4x8x128xf32, #tpu.memory_space<vmem>>, vector<1x1x8x128xf32>
    %18 = vector.shape_cast %17 : vector<1x1x8x128xf32> to vector<8x128xf32>
    %19 = vector.shape_cast %16 : vector<8x128xf32> to vector<1x1x8x128xf32>
    tpu.vector_store %arg3[%c0_18, %c3, %c0_19, %c0_20], %19 {strides = array<i32>} : memref<1x4x8x128xf32, #tpu.memory_space<vmem>>, vector<1x1x8x128xf32>,
    return
  }
  func.func @transform_0(%arg0: i32, %arg1: i32) -> (i32, i32, i32) {
    %c0_i32 = arith.constant 0 : i32
    %c0_i32_0 = arith.constant 0 : i32
    return %arg0, %arg1, %c0_i32 : i32, i32, i32
  }
  func.func @transform_1(%arg0: i32, %arg1: i32) -> (i32, i32, i32, i32) {
    %c0_i32 = arith.constant 0 : i32
    %c0_i32_0 = arith.constant 0 : i32
    %c0_i32_1 = arith.constant 0 : i32
    return %arg0, %c0_i32, %arg1, %c0_i32_0 : i32, i32, i32, i32
  }
}

</mosaic_0001>

<llo_original>
// kernel: tpu_custom_call.1
$region0: #{tpu_custom_call.1}
  #allocation0 [shape = 'u32[]', space=smem, size = 0x4, offset = 0x4, fixed_abs, tag = 'smem constant byte address 0x4 - core index']
  #allocation1 [shape = 'u32[144,128]{1,0:T(1,128)}', space=vmem, size = 0x12000, scoped, tag = 'internal scratch']
  %s0 = inlined_call_operand.hbm [shape: f32[2,8,512], index: 0, kind: input, shape index: {}]
  %s1 = inlined_call_operand.hbm [shape: f32[2,4,8,128], index: 1, kind: output, shape index: {}]
  %s2 = sld [smem:[#allocation0]]
  $region41: #{tpu_custom_call.1} parent=0
    _
  %s4 = ssub.s32 1, %s2
  %s5 = scalar_select 0, %s4, %s2
  $region1: #{tpu_custom_call.1} parent=0
    #allocation2 [shape = 'u8[32768]{0}', space=vmem, size = 0x8000, scoped, tag = 'input window, operand 0']
    #allocation3 [shape = 's32[2]{0}', space=sflag, size = 0x8, scoped, tag = 'scoped memory for tpu_custom_call.1']
    #allocation4 [shape = 's32[2]{0}', space=sflag, size = 0x8, scoped, tag = 'scoped memory for tpu_custom_call.1']
    #allocation5 [shape = 'u8[32768]{0}', space=vmem, size = 0x8000, scoped, tag = 'output window, operand 0']
    %6 = vsyncpa [#allocation3], 0
    %s7 = scalar_lea.sflag [#allocation3], 1
    %8 = vsyncpa %s7, 0
    %9 = vsyncpa [#allocation4], 0
    %s10 = scalar_lea.sflag [#allocation4], 1
    %11 = vsyncpa %s10, 0
    loop: start=0, step=1, limit=4
    $region2: #{tpu_custom_call.1} parent=1 // loop_pre_header
      _
    $region3: #{tpu_custom_call.1} parent=1 // loop_header
      %s13 = sphi 0, %s17
      %p14 = scmp.ge.s32.totalorder %s13, 4
      %s20 = sphi 0, %s32
      %s21 = sphi 0, %s28
      %s22 = sphi 0, %s20
      %s23 = sphi 0, %s21
      %s24 = sphi 0, %s22
      %s25 = sphi 0, %s23
      %s37 = sphi 0, %s39
      %s40 = sphi 0, %s37
      %s41 = sphi 0, %s40
      %s57 = sphi 0, %s41
      %s65 = sphi 0, %s67
      %s68 = sphi 0, %s65
      %s69 = sphi 0, %s68
      %s85 = sphi 0, %s69
    $region4: #{tpu_custom_call.1} parent=1 // loop_header_branch
      %16 = sbr.rel (%p14) target = $region8
    $region5: #{tpu_custom_call.1} parent=1 // loop_body
      %s18 = ssub.s32 %s13, 1
      %s19 = ssub.s32 %s13, 2
      %s26 = sadd.s32 1, %s21
      %p27 = scmp.ge.s32.totalorder %s26, 1
      %s28 = scalar_select %p27, 0, %s26
      %s29 = sadd.s32 1, %s20
      %s30 = scalar_select %p27, %s29, %s20
      %p31 = scmp.ge.s32.totalorder %s30, 2
      %s32 = scalar_select %p31, 0, %s30
      %s33 = ssub.s32 %s20, %s32
      %s34 = ssub.s32 %s21, %s28
      %s35 = sor.u32 %s33, %s34
      %p36 = scmp.eq.s32.totalorder %s35, 0
      %s38 = sadd.s32 %s37, 1
      %s39 = scalar_select %p36, %s37, %s38
      %p42 = pneg %p36
      %p43 = scmp.eq.s32.totalorder %s13, 1
      %p44 = por %p42, %p43
      %p45 = scmp.ne.s32.totalorder %s37, %s40
      %p46 = scmp.eq.s32.totalorder %s13, 0
      %p47 = por %p45, %p46
      %p48 = scmp.ne.s32.totalorder %s37, %s40
      %p49 = scmp.eq.s32.totalorder %s18, 1
      %p50 = por %p48, %p49
      %p51 = scmp.ne.s32.totalorder %s40, %s41
      %p52 = scmp.eq.s32.totalorder %s18, 0
      %p53 = por %p51, %p52
      %p54 = scmp.ne.s32.totalorder %s40, %s41
      %p55 = scmp.eq.s32.totalorder %s19, 1
      %p56 = por %p54, %p55
      %p58 = scmp.ne.s32.totalorder %s41, %s57
      %p59 = scmp.eq.s32.totalorder %s19, 0
      %p60 = por %p58, %p59
      %s61 = ssub.s32 %s20, %s32
      %s62 = ssub.s32 %s21, %s28
      %s63 = sor.u32 %s61, %s62
      %p64 = scmp.eq.s32.totalorder %s63, 0
      %s66 = sadd.s32 %s65, 1
      %s67 = scalar_select %p64, %s65, %s66
      %p70 = pneg %p64
      %p71 = scmp.eq.s32.totalorder %s13, 1
      %p72 = por %p70, %p71
      %p73 = scmp.ne.s32.totalorder %s65, %s68
      %p74 = scmp.eq.s32.totalorder %s13, 0
      %p75 = por %p73, %p74
      %p76 = scmp.ne.s32.totalorder %s65, %s68
      %p77 = scmp.eq.s32.totalorder %s18, 1
      %p78 = por %p76, %p77
      %p79 = scmp.ne.s32.totalorder %s68, %s69
      %p80 = scmp.eq.s32.totalorder %s18, 0
      %p81 = por %p79, %p80
      %p82 = scmp.ne.s32.totalorder %s68, %s69
      %p83 = scmp.eq.s32.totalorder %s19, 1
      %p84 = por %p82, %p83
      %p86 = scmp.ne.s32.totalorder %s69, %s85
      %p87 = scmp.eq.s32.totalorder %s19, 0
      %p88 = por %p86, %p87
      %p89 = scmp.le.s32.totalorder 1, %s13
      %p90 = scmp.lt.s32.totalorder %s13, 3
      %p91 = pnand %p89, %p90
      %p92 = pneg %p91
      // Predicated region
      $region9: #{tpu_custom_call.1} parent=5 // pred_check
        _
      $region10: #{tpu_custom_call.1} parent=5 // pred_check_branch
        %94 = sbr.rel (%p91) target = $region12
      $region11: #{tpu_custom_call.1} parent=5 // pred_region
        %s95 = ssub.s32 %s13, 1
      $region12: #{tpu_custom_call.1} parent=5 // pred_fallthru
        _
      %p96 = scmp.lt.s32.totalorder %s13, 2
      // Predicated region
      $region13: #{tpu_custom_call.1} parent=5 // pred_check
        %p97 = pneg %p96
      $region14: #{tpu_custom_call.1} parent=5 // pred_check_branch
        %99 = sbr.rel (%p97) target = $region16
      $region15: #{tpu_custom_call.1} parent=5 // pred_region
        // Predicated region
        $region17: #{tpu_custom_call.1} parent=15 // pred_check
          %p100 = pneg %p47
        $region18: #{tpu_custom_call.1} parent=15 // pred_check_branch
          %102 = sbr.rel (%p100) target = $region20
        $region19: #{tpu_custom_call.1} parent=15 // pred_region
          %s103 = sand.u32 %s37, 1
          %s104 = scalar_lea.sflag [#allocation3], %s103
          %s105 = sand.u32 %s37, 1
          %s106 = smul.addr %s105, 32
          %s107 = scalar_lea.vmem [#allocation2], %s106
          %s109 = ssub.s32 512, 512
          %110 = vsyncadd %s104, %s109
          %s111 = smul.addr %s21, 4
          %s112 = smul.addr %s20, 4
          %s113 = sadd.s32 %s111, %s112
          %s114 = smul.addr %s113, 128
          %s115 = scalar_lea.hbm %s0, %s114
          %s117 = sshll.u32 %s107, 4
          %s118 = int_to_ptr.vmem [resolvable:$true] %s117
          %120 = dma.hbm_to_vmem [thread:$0]  %s115, 512, %s118, %s104
        $region20: #{tpu_custom_call.1} parent=15 // pred_fallthru
          _
      $region16: #{tpu_custom_call.1} parent=5 // pred_fallthru
        _
      %p121 = scmp.le.s32.totalorder 1, %s13
      %p122 = scmp.lt.s32.totalorder %s13, 3
      %p123 = pnand %p121, %p122
      %p124 = pneg %p123
      // Predicated region
      $region21: #{tpu_custom_call.1} parent=5 // pred_check
        _
      $region22: #{tpu_custom_call.1} parent=5 // pred_check_branch
        %126 = sbr.rel (%p123) target = $region24
      $region23: #{tpu_custom_call.1} parent=5 // pred_region
        %s127 = ssub.s32 %s13, 1
        %s128 = sand.u32 %s40, 1
        %s129 = scalar_lea.sflag [#allocation3], %s128
        %s130 = sand.u32 %s40, 1
        %s131 = smul.addr %s130, 32
        %s132 = scalar_lea.vmem [#allocation2], %s131
        // Predicated region
        $region25: #{tpu_custom_call.1} parent=23 // pred_check
          %p133 = pneg %p53
        $region26: #{tpu_custom_call.1} parent=23 // pred_check_branch
          %135 = sbr.rel (%p133) target = $region28
        $region27: #{tpu_custom_call.1} parent=23 // pred_region
          %136 = dma.done %s129, 512
        $region28: #{tpu_custom_call.1} parent=23 // pred_fallthru
          _
        %s137 = sand.u32 %s40, 1
        %s138 = scalar_lea.sflag [#allocation3], %s137
        %s139 = sand.u32 %s40, 1
        %s140 = smul.addr %s139, 32
        %s141 = scalar_lea.vmem [#allocation2], %s140
        %p142 = pneg %p53
        %p143 = pneg %p50
        %p144 = pneg %p81
        %p145 = pneg %p78
        %s146 = sand.u32 %s68, 1
        %s147 = scalar_lea.sflag [#allocation4], %s146
        %s148 = sand.u32 %s68, 1
        %s149 = smul.addr %s148, 32
        %s150 = scalar_lea.vmem [#allocation5], %s149
        %v151 = vld [vmem:[%s132] sm:$0xff]
        %152 = vst [vmem:[%s150] sm:$0xff] %v151
        %v153 = vld [vmem:[%s132 + $0x8] sm:$0xff]
        %s154 = scalar_lea.vmem %s150, 8 [#allocation5]
        %155 = vst [vmem:[%s154] sm:$0xff] %v153
        %v156 = vld [vmem:[%s132 + $0x10] sm:$0xff]
        %s157 = scalar_lea.vmem %s150, 16 [#allocation5]
        %158 = vst [vmem:[%s157] sm:$0xff] %v156
        %v159 = vld [vmem:[%s132 + $0x18] sm:$0xff]
        %s160 = scalar_lea.vmem %s150, 24 [#allocation5]
        %161 = vst [vmem:[%s160] sm:$0xff] %v159
        %s162 = sand.u32 %s68, 1
        %s163 = scalar_lea.sflag [#allocation4], %s162
        %s164 = sand.u32 %s68, 1
        %s165 = smul.addr %s164, 32
        %s166 = scalar_lea.vmem [#allocation5], %s165
        // Predicated region
        $region29: #{tpu_custom_call.1} parent=23 // pred_check
          %p167 = pneg %p78
        $region30: #{tpu_custom_call.1} parent=23 // pred_check_branch
          %169 = sbr.rel (%p167) target = $region32
        $region31: #{tpu_custom_call.1} parent=23 // pred_region
          %s171 = ssub.s32 512, 512
          %172 = vsyncadd %s163, %s171
          %s173 = smul.addr %s22, 4
          %s174 = sadd.s32 %s23, %s173
          %s175 = smul.addr %s174, 128
          %s176 = scalar_lea.hbm %s1, %s175
          %s177 = sshll.u32 %s166, 4
          %s178 = int_to_ptr.vmem [resolvable:$true] %s177
          %183 = dma.vmem_to_hbm [thread:$0]  %s178, 512, %s176, %s163, 128, 128, 8
        $region32: #{tpu_custom_call.1} parent=23 // pred_fallthru
          _
      $region24: #{tpu_custom_call.1} parent=5 // pred_fallthru
        _
      %p184 = scmp.le.s32.totalorder 2, %s13
      // Predicated region
      $region33: #{tpu_custom_call.1} parent=5 // pred_check
        %p185 = pneg %p184
      $region34: #{tpu_custom_call.1} parent=5 // pred_check_branch
        %187 = sbr.rel (%p185) target = $region36
      $region35: #{tpu_custom_call.1} parent=5 // pred_region
        %s188 = ssub.s32 %s13, 2
        // Predicated region
        $region37: #{tpu_custom_call.1} parent=35 // pred_check
          %p189 = pneg %p84
        $region38: #{tpu_custom_call.1} parent=35 // pred_check_branch
          %191 = sbr.rel (%p189) target = $region40
        $region39: #{tpu_custom_call.1} parent=35 // pred_region
          %s192 = sand.u32 %s69, 1
          %s193 = scalar_lea.sflag [#allocation4], %s192
          %s194 = sand.u32 %s69, 1
          %s195 = smul.addr %s194, 32
          %s196 = scalar_lea.vmem [#allocation5], %s195
          %197 = dma.done %s193, 512
        $region40: #{tpu_custom_call.1} parent=35 // pred_fallthru
          _
      $region36: #{tpu_custom_call.1} parent=5 // pred_fallthru
        _
    $region6: #{tpu_custom_call.1} parent=1 // loop_footer
      %s17 = sadd.s32 1, %s13
    $region7: #{tpu_custom_call.1} parent=1 // loop_footer_branch
      %12 = sbr.rel target = $region3
    $region8: #{tpu_custom_call.1} parent=1 // loop_exit
      _
    %198 = vsyncpa [#allocation3], 1
    %s199 = scalar_lea.sflag [#allocation3], 1
    %200 = vsyncpa %s199, 1
    %201 = vsyncpa [#allocation4], 1
    %s202 = scalar_lea.sflag [#allocation4], 1
    %203 = vsyncpa %s202, 1

</llo_original>
